<compile_context>
chip_gen: v7x
topology: tpu7x:2x2x1
jax: 0.10.0
libtpu: 0.0.40
codegen_flags: <defaults>
</compile_context>

<pallas_src>
import functools

import jax
import jax.numpy as jnp
from jax.experimental import pallas as pl
from jax.experimental.pallas import tpu as pltpu

NUM_CLASSES = 10
LANE = 128  # lane-dense padded logits width


def conv_pool_kernel(x_ref, w1_ref, b1_ref, w2_ref, b2_ref, pooled_ref, acc_ref):
    """Per-point MLP (1x1 convs) + running max over the point axis."""
    n = pl.program_id(1)

    @pl.when(n == 0)
    def _init():
        # -inf is the safe running-max identity (h2 is post-ReLU so >= 0, but
        # keep the general invariant).
        acc_ref[...] = jnp.full(acc_ref.shape, -jnp.inf, acc_ref.dtype)

    x = x_ref[0]                                                   # (TN, 3)
    # conv1 (1x1) + relu -> one MXU matmul over the whole tile (no Python batch loop)
    h1 = jnp.dot(x, w1_ref[...], preferred_element_type=jnp.float32) + b1_ref[...]
    h1 = jnp.maximum(h1, 0.0)                                      # (TN, 64)
    # conv2 (1x1) + relu
    h2 = jnp.dot(h1, w2_ref[...], preferred_element_type=jnp.float32) + b2_ref[...]
    h2 = jnp.maximum(h2, 0.0)                                      # (TN, 128)
    # fold this tile into the running per-batch max
    acc_ref[...] = jnp.maximum(acc_ref[...], jnp.max(h2, axis=0, keepdims=True))

    @pl.when(n == pl.num_programs(1) - 1)
    def _finalize():
        pooled_ref[0] = acc_ref[...]                               # (1, 128)


def fc_kernel(p_ref, w3_ref, b3_ref, w4_ref, b4_ref, o_ref):
    """Batched FC head over all B rows: (B,128)->(B,256)->(B,LANE) padded logits."""
    f1 = jnp.dot(p_ref[...], w3_ref[...], preferred_element_type=jnp.float32) + b3_ref[...]
    f1 = jnp.maximum(f1, 0.0)                                      # (B, 256)
    o_ref[...] = (jnp.dot(f1, w4_ref[...], preferred_element_type=jnp.float32)
                  + b4_ref[...])                                   # (B, LANE), lane-dense store


def pointnet_forward(x_ncw, params, *, tn=512):
    """x_ncw: (B, 3, N) float32, same convention as the PyTorch module."""
    x = jnp.transpose(x_ncw, (0, 2, 1)).astype(jnp.float32)        # (B, N, 3)
    B, N, C = x.shape
    tn = min(tn, N)
    assert N % tn == 0 and (tn % 8 == 0 or tn == N), (N, tn)

    c1 = params["w1"].shape[1]    # 64
    c2 = params["w2"].shape[1]    # 128
    c3 = params["w3"].shape[1]    # 256

    # ---- stage 1: per-point MLP + max-pool over points -------------------
    pooled = pl.pallas_call(
        conv_pool_kernel,
        out_shape=jax.ShapeDtypeStruct((B, 1, c2), jnp.float32),
        grid_spec=pltpu.PrefetchScalarGridSpec(
            num_scalar_prefetch=0,
            grid=(B, N // tn),
            in_specs=[
                pl.BlockSpec((1, tn, C), lambda b, n: (b, n, 0)),   # point tile (pipelined)
                pl.BlockSpec((C, c1), lambda b, n: (0, 0)),         # w1 (resident)
                pl.BlockSpec((1, c1), lambda b, n: (0, 0)),         # b1
                pl.BlockSpec((c1, c2), lambda b, n: (0, 0)),        # w2
                pl.BlockSpec((1, c2), lambda b, n: (0, 0)),         # b2
            ],
            out_specs=pl.BlockSpec((1, 1, c2), lambda b, n: (b, 0, 0)),
            scratch_shapes=[pltpu.VMEM((1, c2), jnp.float32)],      # running-max accumulator
        ),
        compiler_params=pltpu.CompilerParams(
            dimension_semantics=("parallel", "arbitrary")),
    )(x, params["w1"], params["b1"], params["w2"], params["b2"])

    # ---- stage 2: batched FC head ----------------------------------------
    pooled2d = pooled.reshape(B, c2)                               # (B, 128)
    # zero-pad fc2 to 128 output lanes -> unmasked, lane-dense final store
    w4p = jnp.zeros((c3, LANE), jnp.float32).at[:, :NUM_CLASSES].set(params["w4"])
    b4p = jnp.zeros((1, LANE), jnp.float32).at[:, :NUM_CLASSES].set(params["b4"])

    logits_pad = pl.pallas_call(
        fc_kernel,
        out_shape=jax.ShapeDtypeStruct((B, LANE), jnp.float32),
        in_specs=[pl.BlockSpec(memory_space=pltpu.MemorySpace.VMEM)] * 5,
        out_specs=pl.BlockSpec(memory_space=pltpu.MemorySpace.VMEM),
    )(pooled2d, params["w3"], params["b3"], w4p, b4p)
    return logits_pad[:, :NUM_CLASSES]


def init_params(key):
    """Deterministic PyTorch-default-style init (uniform +/- 1/sqrt(fan_in))."""
    ks = jax.random.split(key, 8)

    def u(k, shape, fan_in):
        bound = 1.0 / jnp.sqrt(jnp.float32(fan_in))
        return jax.random.uniform(k, shape, jnp.float32, -bound, bound)

    # Weights kept as (in, out); equivalent to PyTorch's (out, in) transposed.
    return {
        "w1": u(ks[0], (3, 64), 3),       "b1": u(ks[1], (1, 64), 3),
        "w2": u(ks[2], (64, 128), 64),    "b2": u(ks[3], (1, 128), 64),
        "w3": u(ks[4], (128, 256), 128),  "b3": u(ks[5], (1, 256), 128),
        "w4": u(ks[6], (256, 10), 256),   "b4": u(ks[7], (1, 10), 256),
    }


def pointnet_reference(x_ncw, params):
    """Pure-JAX reference reproducing the PyTorch forward semantics (full f32)."""
    with jax.default_matmul_precision("highest"):
        x = jnp.transpose(x_ncw, (0, 2, 1))                        # (B, N, 3)
        h1 = jax.nn.relu(x @ params["w1"] + params["b1"])          # (B, N, 64)
        h2 = jax.nn.relu(h1 @ params["w2"] + params["b2"])         # (B, N, 128)
        pooled = jnp.max(h2, axis=1)                               # (B, 128)
        f1 = jax.nn.relu(pooled @ params["w3"] + params["b3"][0])  # (B, 256)
        return f1 @ params["w4"] + params["b4"][0]                 # (B, 10)


if __name__ == "__main__":
    key = jax.random.PRNGKey(0)
    k_x, k_p = jax.random.split(key)

    B, N = 2, 256                                  # small batch, 256 points per cloud
    x = jax.random.normal(k_x, (B, 3, N), dtype=jnp.float32)       # PyTorch NCW layout
    params = init_params(k_p)

    fwd = jax.jit(functools.partial(pointnet_forward, tn=128))     # 2 N-tiles per batch
    out = jax.block_until_ready(fwd(x, params))

    ref = pointnet_reference(x, params)
    assert out.shape == (B, NUM_CLASSES)
    assert jnp.allclose(out, ref, atol=1e-4, rtol=1e-4), float(jnp.max(jnp.abs(out - ref)))

    print("KERNEL_OK")
</pallas_src>

<mosaic_0001>
module attributes {stable_mosaic.version = 11 : i64} {
  func.func @conv_pool_kernel(%arg0: i32, %arg1: i32, %arg2: memref<1x128x3xf32, #tpu.memory_space<vmem>>, %arg3: memref<3x64xf32, #tpu.memory_space<vmem>>, %arg4: memref<1x64xf32, #tpu.memory_space<vmem>>, %arg5: memref<64x128xf32, #tpu.memory_space<vmem>>, %arg6: memref<1x128xf32, #tpu.memory_space<vmem>>, %arg7: memref<1x1x128xf32, #tpu.memory_space<vmem>>, %arg8: memref<1x128xf32, #tpu.memory_space<vmem>>) attributes {dimension_semantics = [#tpu.dimension_semantics<parallel>, #tpu.dimension_semantics<arbitrary>], iteration_bounds = array<i64: 2, 2>, scalar_prefetch = 0 : i64, scratch_operands = 1 : i64, tpu.core_type = #tpu.core_type<tc>, window_params = [{transform_indices = @transform_0, window_bounds = array<i64: 1, 128, 3>}, {pipeline_mode = #tpu.pipeline_mode<synchronous>, transform_indices = @transform_1, window_bounds = array<i64: 3, 64>}, {pipeline_mode = #tpu.pipeline_mode<synchronous>, transform_indices = @transform_2, window_bounds = array<i64: 1, 64>}, {pipeline_mode = #tpu.pipeline_mode<synchronous>, transform_indices = @transform_3, window_bounds = array<i64: 64, 128>}, {pipeline_mode = #tpu.pipeline_mode<synchronous>, transform_indices = @transform_4, window_bounds = array<i64: 1, 128>}, {transform_indices = @transform_5, window_bounds = array<i64: 1, 1, 128>}]} {
    %c0_i32 = arith.constant 0 : i32
    %0 = arith.cmpi eq, %arg1, %c0_i32 : i32
    %1 = arith.extui %0 : i1 to i32
    %c0_i32_0 = arith.constant 0 : i32
    %2 = arith.cmpi ne, %1, %c0_i32_0 : i32
    scf.if %2 {
      %cst_20 = arith.constant 0xFF800000 : f32
      %27 = vector.broadcast %cst_20 : f32 to vector<1x128xf32>
      %c0_21 = arith.constant 0 : index
      %c0_22 = arith.constant 0 : index
      %28 = vector.load %arg8[%c0_21, %c0_22] : memref<1x128xf32, #tpu.memory_space<vmem>>, vector<1x128xf32>
      tpu.vector_store %arg8[%c0_21, %c0_22], %27 {strides = array<i32>} : memref<1x128xf32, #tpu.memory_space<vmem>>, vector<1x128xf32>,
    } else {
    }
    %c0 = arith.constant 0 : index
    %c0_1 = arith.constant 0 : index
    %c0_2 = arith.constant 0 : index
    %3 = vector.load %arg2[%c0, %c0_1, %c0_2] : memref<1x128x3xf32, #tpu.memory_space<vmem>>, vector<1x128x3xf32>
    %4 = vector.shape_cast %3 : vector<1x128x3xf32> to vector<128x3xf32>
    %c0_3 = arith.constant 0 : index
    %c0_4 = arith.constant 0 : index
    %5 = vector.load %arg3[%c0_3, %c0_4] : memref<3x64xf32, #tpu.memory_space<vmem>>, vector<3x64xf32>
    %cst = arith.constant dense<0.000000e+00> : vector<128x64xf32>
    %6 = tpu.matmul %4, %5, %cst {dimension_numbers = #tpu.dot_dimension_numbers<[1], [0], [0], [1], [0, 0, 1, 1], [], []>} : vector<128x3xf32>, vector<3x64xf32>, vector<128x64xf32> -> vector<128x64xf32>
    %c0_5 = arith.constant 0 : index
    %c0_6 = arith.constant 0 : index
    %7 = vector.load %arg4[%c0_5, %c0_6] : memref<1x64xf32, #tpu.memory_space<vmem>>, vector<1x64xf32>
    %8 = vector.broadcast %7 : vector<1x64xf32> to vector<128x64xf32>
    %9 = arith.addf %6, %8 : vector<128x64xf32>
    %cst_7 = arith.constant 0.000000e+00 : f32
    %10 = vector.broadcast %cst_7 : f32 to vector<128x64xf32>
    %11 = arith.maximumf %9, %10 : vector<128x64xf32>
    %c0_8 = arith.constant 0 : index
    %c0_9 = arith.constant 0 : index
    %12 = vector.load %arg5[%c0_8, %c0_9] : memref<64x128xf32, #tpu.memory_space<vmem>>, vector<64x128xf32>
    %cst_10 = arith.constant dense<0.000000e+00> : vector<128x128xf32>
    %13 = tpu.matmul %11, %12, %cst_10 {dimension_numbers = #tpu.dot_dimension_numbers<[1], [0], [0], [1], [0, 0, 1, 1], [], []>} : vector<128x64xf32>, vector<64x128xf32>, vector<128x128xf32> -> vector<128x128xf32>
    %c0_11 = arith.constant 0 : index
    %c0_12 = arith.constant 0 : index
    %14 = vector.load %arg6[%c0_11, %c0_12] : memref<1x128xf32, #tpu.memory_space<vmem>>, vector<1x128xf32>
    %15 = vector.broadcast %14 : vector<1x128xf32> to vector<128x128xf32>
    %16 = arith.addf %13, %15 : vector<128x128xf32>
    %cst_13 = arith.constant 0.000000e+00 : f32
    %17 = vector.broadcast %cst_13 : f32 to vector<128x128xf32>
    %18 = arith.maximumf %16, %17 : vector<128x128xf32>
    %c0_14 = arith.constant 0 : index
    %c0_15 = arith.constant 0 : index
    %19 = vector.load %arg8[%c0_14, %c0_15] : memref<1x128xf32, #tpu.memory_space<vmem>>, vector<1x128xf32>
    %cst_16 = arith.constant dense<0xFF800000> : vector<128xf32>
    %20 = vector.multi_reduction <maximumf>, %18, %cst_16 [0] : vector<128x128xf32> to vector<128xf32>
    %21 = vector.shape_cast %20 : vector<128xf32> to vector<1x128xf32>
    %22 = arith.maximumf %19, %21 : vector<1x128xf32>
    %c0_17 = arith.constant 0 : index
    %c0_18 = arith.constant 0 : index
    %23 = vector.load %arg8[%c0_17, %c0_18] : memref<1x128xf32, #tpu.memory_space<vmem>>, vector<1x128xf32>
    tpu.vector_store %arg8[%c0_17, %c0_18], %22 {strides = array<i32>} : memref<1x128xf32, #tpu.memory_space<vmem>>, vector<1x128xf32>,
    %c1_i32 = arith.constant 1 : i32
    %24 = arith.cmpi eq, %arg1, %c1_i32 : i32
    %25 = arith.extui %24 : i1 to i32
    %c0_i32_19 = arith.constant 0 : i32
    %26 = arith.cmpi ne, %25, %c0_i32_19 : i32
    scf.if %26 {
      %c0_20 = arith.constant 0 : index
      %c0_21 = arith.constant 0 : index
      %27 = vector.load %arg8[%c0_20, %c0_21] : memref<1x128xf32, #tpu.memory_space<vmem>>, vector<1x128xf32>
      %c0_22 = arith.constant 0 : index
      %c0_23 = arith.constant 0 : index
      %c0_24 = arith.constant 0 : index
      %28 = vector.load %arg7[%c0_22, %c0_23, %c0_24] : memref<1x1x128xf32, #tpu.memory_space<vmem>>, vector<1x1x128xf32>
      %29 = vector.shape_cast %28 : vector<1x1x128xf32> to vector<1x128xf32>
      %30 = vector.shape_cast %27 : vector<1x128xf32> to vector<1x1x128xf32>
      tpu.vector_store %arg7[%c0_22, %c0_23, %c0_24], %30 {strides = array<i32>} : memref<1x1x128xf32, #tpu.memory_space<vmem>>, vector<1x1x128xf32>,
    } else {
    }
    return
  }
  func.func @transform_0(%arg0: i32, %arg1: i32) -> (i32, i32, i32) {
    %c0_i32 = arith.constant 0 : i32
    %c0_i32_0 = arith.constant 0 : i32
    return %arg0, %arg1, %c0_i32 : i32, i32, i32
  }
  func.func @transform_1(%arg0: i32, %arg1: i32) -> (i32, i32) {
    %c0_i32 = arith.constant 0 : i32
    %c0_i32_0 = arith.constant 0 : i32
    %c0_i32_1 = arith.constant 0 : i32
    return %c0_i32, %c0_i32_0 : i32, i32
  }
  func.func @transform_2(%arg0: i32, %arg1: i32) -> (i32, i32) {
    %c0_i32 = arith.constant 0 : i32
    %c0_i32_0 = arith.constant 0 : i32
    %c0_i32_1 = arith.constant 0 : i32
    return %c0_i32, %c0_i32_0 : i32, i32
  }
  func.func @transform_3(%arg0: i32, %arg1: i32) -> (i32, i32) {
    %c0_i32 = arith.constant 0 : i32
    %c0_i32_0 = arith.constant 0 : i32
    %c0_i32_1 = arith.constant 0 : i32
    return %c0_i32, %c0_i32_0 : i32, i32
  }
  func.func @transform_4(%arg0: i32, %arg1: i32) -> (i32, i32) {
    %c0_i32 = arith.constant 0 : i32
    %c0_i32_0 = arith.constant 0 : i32
    %c0_i32_1 = arith.constant 0 : i32
    return %c0_i32, %c0_i32_0 : i32, i32
  }
  func.func @transform_5(%arg0: i32, %arg1: i32) -> (i32, i32, i32) {
    %c0_i32 = arith.constant 0 : i32
    %c0_i32_0 = arith.constant 0 : i32
    %c0_i32_1 = arith.constant 0 : i32
    return %arg0, %c0_i32, %c0_i32_0 : i32, i32, i32
  }
}

module attributes {stable_mosaic.version = 11 : i64} {
  func.func @fc_kernel(%arg0: memref<2x128xf32, #tpu.memory_space<vmem>>, %arg1: memref<128x256xf32, #tpu.memory_space<vmem>>, %arg2: memref<1x256xf32, #tpu.memory_space<vmem>>, %arg3: memref<256x128xf32, #tpu.memory_space<vmem>>, %arg4: memref<1x128xf32, #tpu.memory_space<vmem>>, %arg5: memref<2x128xf32, #tpu.memory_space<vmem>>) attributes {dimension_semantics = [], scalar_prefetch = 0 : i64, scratch_operands = 0 : i64, tpu.core_type = #tpu.core_type<tc>} {
    %c0 = arith.constant 0 : index
    %c0_0 = arith.constant 0 : index
    %0 = vector.load %arg0[%c0, %c0_0] : memref<2x128xf32, #tpu.memory_space<vmem>>, vector<2x128xf32>
    %c0_1 = arith.constant 0 : index
    %c0_2 = arith.constant 0 : index
    %1 = vector.load %arg1[%c0_1, %c0_2] : memref<128x256xf32, #tpu.memory_space<vmem>>, vector<128x256xf32>
    %cst = arith.constant dense<0.000000e+00> : vector<2x256xf32>
    %2 = tpu.matmul %0, %1, %cst {dimension_numbers = #tpu.dot_dimension_numbers<[1], [0], [0], [1], [0, 0, 1, 1], [], []>} : vector<2x128xf32>, vector<128x256xf32>, vector<2x256xf32> -> vector<2x256xf32>
    %c0_3 = arith.constant 0 : index
    %c0_4 = arith.constant 0 : index
    %3 = vector.load %arg2[%c0_3, %c0_4] : memref<1x256xf32, #tpu.memory_space<vmem>>, vector<1x256xf32>
    %4 = vector.broadcast %3 : vector<1x256xf32> to vector<2x256xf32>
    %5 = arith.addf %2, %4 : vector<2x256xf32>
    %cst_5 = arith.constant 0.000000e+00 : f32
    %6 = vector.broadcast %cst_5 : f32 to vector<2x256xf32>
    %7 = arith.maximumf %5, %6 : vector<2x256xf32>
    %c0_6 = arith.constant 0 : index
    %c0_7 = arith.constant 0 : index
    %8 = vector.load %arg3[%c0_6, %c0_7] : memref<256x128xf32, #tpu.memory_space<vmem>>, vector<256x128xf32>
    %cst_8 = arith.constant dense<0.000000e+00> : vector<2x128xf32>
    %9 = tpu.matmul %7, %8, %cst_8 {dimension_numbers = #tpu.dot_dimension_numbers<[1], [0], [0], [1], [0, 0, 1, 1], [], []>} : vector<2x256xf32>, vector<256x128xf32>, vector<2x128xf32> -> vector<2x128xf32>
    %c0_9 = arith.constant 0 : index
    %c0_10 = arith.constant 0 : index
    %10 = vector.load %arg4[%c0_9, %c0_10] : memref<1x128xf32, #tpu.memory_space<vmem>>, vector<1x128xf32>
    %11 = vector.broadcast %10 : vector<1x128xf32> to vector<2x128xf32>
    %12 = arith.addf %9, %11 : vector<2x128xf32>
    %c0_11 = arith.constant 0 : index
    %c0_12 = arith.constant 0 : index
    %13 = vector.load %arg5[%c0_11, %c0_12] : memref<2x128xf32, #tpu.memory_space<vmem>>, vector<2x128xf32>
    tpu.vector_store %arg5[%c0_11, %c0_12], %12 {strides = array<i32>} : memref<2x128xf32, #tpu.memory_space<vmem>>, vector<2x128xf32>,
    return
  }
}

</mosaic_0001>

<llo_original>
// kernel: pointnet_forward.2
$region0: #{pointnet_forward.2}
  #allocation0 [shape = 'u32[]', space=smem, size = 0x4, offset = 0x4, fixed_abs, tag = 'smem constant byte address 0x4 - core index']
  #allocation1 [shape = 'u32[144,128]{1,0:T(1,128)}', space=vmem, size = 0x12000, scoped, tag = 'internal scratch']
  #allocation2 [shape = 'f32[1,128]{1,0:T(1,128)}', space=vmem, size = 0x200, scoped, tag = 'scratch operand']
  %s0 = inlined_call_operand.vmem [shape: f32[2,256,3], index: 0, kind: input, shape index: {}]
  %s1 = inlined_call_operand.vmem [shape: f32[3,64], index: 1, kind: input, shape index: {}]
  %s2 = inlined_call_operand.vmem [shape: f32[1,64], index: 2, kind: input, shape index: {}]
  %s3 = inlined_call_operand.vmem [shape: f32[64,128], index: 3, kind: input, shape index: {}]
  %s4 = inlined_call_operand.vmem [shape: f32[1,128], index: 4, kind: input, shape index: {}]
  %s5 = inlined_call_operand.vmem [shape: f32[2,1,128], index: 5, kind: output, shape index: {}]
  %s6 = sld [smem:[#allocation0]]
  $region61: #{pointnet_forward.2} parent=0
    _
  %s8 = ssub.s32 1, %s6
  %s9 = scalar_select 0, %s8, %s6
  loop: start=0, step=1, limit=6
  $region2: #{pointnet_forward.2} parent=0 // loop_pre_header
    _
  $region3: #{pointnet_forward.2} parent=0 // loop_header
    %s11 = sphi 0, %s15
    %p12 = scmp.ge.s32.totalorder %s11, 6
    %s18 = sphi 0, %s30
    %s19 = sphi 0, %s26
    %s20 = sphi 0, %s18
    %s21 = sphi 0, %s19
    %s22 = sphi 0, %s20
    %s23 = sphi 0, %s21
    %s35 = sphi 0, %s37
    %s38 = sphi 0, %s35
    %s39 = sphi 0, %s38
    %s55 = sphi 0, %s39
    %s59 = sphi 0, %s59
    %s61 = sphi 0, %s59
    %s62 = sphi 0, %s61
    %s76 = sphi 0, %s62
    %s80 = sphi 0, %s80
    %s82 = sphi 0, %s80
    %s83 = sphi 0, %s82
    %s97 = sphi 0, %s83
    %s101 = sphi 0, %s101
    %s103 = sphi 0, %s101
    %s104 = sphi 0, %s103
    %s118 = sphi 0, %s104
    %s122 = sphi 0, %s122
    %s124 = sphi 0, %s122
    %s125 = sphi 0, %s124
    %s139 = sphi 0, %s125
    %s145 = sphi 0, %s147
    %s148 = sphi 0, %s145
    %s149 = sphi 0, %s148
    %s165 = sphi 0, %s149
  $region4: #{pointnet_forward.2} parent=0 // loop_header_branch
    %14 = sbr.rel (%p12) target = $region8
  $region5: #{pointnet_forward.2} parent=0 // loop_body
    %s16 = ssub.s32 %s11, 1
    %s17 = ssub.s32 %s11, 2
    %s24 = sadd.s32 1, %s19
    %p25 = scmp.ge.s32.totalorder %s24, 2
    %s26 = scalar_select %p25, 0, %s24
    %s27 = sadd.s32 1, %s18
    %s28 = scalar_select %p25, %s27, %s18
    %p29 = scmp.ge.s32.totalorder %s28, 2
    %s30 = scalar_select %p29, 0, %s28
    %s31 = ssub.s32 %s18, %s30
    %s32 = ssub.s32 %s19, %s26
    %s33 = sor.u32 %s31, %s32
    %p34 = scmp.eq.s32.totalorder %s33, 0
    %s36 = sadd.s32 %s35, 1
    %s37 = scalar_select %p34, %s35, %s36
    %p40 = pneg %p34
    %p41 = scmp.eq.s32.totalorder %s11, 3
    %p42 = por %p40, %p41
    %p43 = scmp.ne.s32.totalorder %s35, %s38
    %p44 = scmp.eq.s32.totalorder %s11, 0
    %p45 = por %p43, %p44
    %p46 = scmp.ne.s32.totalorder %s35, %s38
    %p47 = scmp.eq.s32.totalorder %s16, 3
    %p48 = por %p46, %p47
    %p49 = scmp.ne.s32.totalorder %s38, %s39
    %p50 = scmp.eq.s32.totalorder %s16, 0
    %p51 = por %p49, %p50
    %p52 = scmp.ne.s32.totalorder %s38, %s39
    %p53 = scmp.eq.s32.totalorder %s17, 3
    %p54 = por %p52, %p53
    %p56 = scmp.ne.s32.totalorder %s39, %s55
    %p57 = scmp.eq.s32.totalorder %s17, 0
    %p58 = por %p56, %p57
    %s60 = sadd.s32 %s59, 1
    %p63 = scmp.eq.s32.totalorder %s11, 3
    %p64 = scmp.ne.s32.totalorder %s59, %s61
    %p65 = scmp.eq.s32.totalorder %s11, 0
    %p66 = por %p64, %p65
    %p67 = scmp.ne.s32.totalorder %s59, %s61
    %p68 = scmp.eq.s32.totalorder %s16, 3
    %p69 = por %p67, %p68
    %p70 = scmp.ne.s32.totalorder %s61, %s62
    %p71 = scmp.eq.s32.totalorder %s16, 0
    %p72 = por %p70, %p71
    %p73 = scmp.ne.s32.totalorder %s61, %s62
    %p74 = scmp.eq.s32.totalorder %s17, 3
    %p75 = por %p73, %p74
    %p77 = scmp.ne.s32.totalorder %s62, %s76
    %p78 = scmp.eq.s32.totalorder %s17, 0
    %p79 = por %p77, %p78
    %s81 = sadd.s32 %s80, 1
    %p84 = scmp.eq.s32.totalorder %s11, 3
    %p85 = scmp.ne.s32.totalorder %s80, %s82
    %p86 = scmp.eq.s32.totalorder %s11, 0
    %p87 = por %p85, %p86
    %p88 = scmp.ne.s32.totalorder %s80, %s82
    %p89 = scmp.eq.s32.totalorder %s16, 3
    %p90 = por %p88, %p89
    %p91 = scmp.ne.s32.totalorder %s82, %s83
    %p92 = scmp.eq.s32.totalorder %s16, 0
    %p93 = por %p91, %p92
    %p94 = scmp.ne.s32.totalorder %s82, %s83
    %p95 = scmp.eq.s32.totalorder %s17, 3
    %p96 = por %p94, %p95
    %p98 = scmp.ne.s32.totalorder %s83, %s97
    %p99 = scmp.eq.s32.totalorder %s17, 0
    %p100 = por %p98, %p99
    %s102 = sadd.s32 %s101, 1
    %p105 = scmp.eq.s32.totalorder %s11, 3
    %p106 = scmp.ne.s32.totalorder %s101, %s103
    %p107 = scmp.eq.s32.totalorder %s11, 0
    %p108 = por %p106, %p107
    %p109 = scmp.ne.s32.totalorder %s101, %s103
    %p110 = scmp.eq.s32.totalorder %s16, 3
    %p111 = por %p109, %p110
    %p112 = scmp.ne.s32.totalorder %s103, %s104
    %p113 = scmp.eq.s32.totalorder %s16, 0
    %p114 = por %p112, %p113
    %p115 = scmp.ne.s32.totalorder %s103, %s104
    %p116 = scmp.eq.s32.totalorder %s17, 3
    %p117 = por %p115, %p116
    %p119 = scmp.ne.s32.totalorder %s104, %s118
    %p120 = scmp.eq.s32.totalorder %s17, 0
    %p121 = por %p119, %p120
    %s123 = sadd.s32 %s122, 1
    %p126 = scmp.eq.s32.totalorder %s11, 3
    %p127 = scmp.ne.s32.totalorder %s122, %s124
    %p128 = scmp.eq.s32.totalorder %s11, 0
    %p129 = por %p127, %p128
    %p130 = scmp.ne.s32.totalorder %s122, %s124
    %p131 = scmp.eq.s32.totalorder %s16, 3
    %p132 = por %p130, %p131
    %p133 = scmp.ne.s32.totalorder %s124, %s125
    %p134 = scmp.eq.s32.totalorder %s16, 0
    %p135 = por %p133, %p134
    %p136 = scmp.ne.s32.totalorder %s124, %s125
    %p137 = scmp.eq.s32.totalorder %s17, 3
    %p138 = por %p136, %p137
    %p140 = scmp.ne.s32.totalorder %s125, %s139
    %p141 = scmp.eq.s32.totalorder %s17, 0
    %p142 = por %p140, %p141
    %s143 = ssub.s32 %s18, %s30
    %p144 = scmp.eq.s32.totalorder %s143, 0
    %s146 = sadd.s32 %s145, 1
    %s147 = scalar_select %p144, %s145, %s146
    %p150 = pneg %p144
    %p151 = scmp.eq.s32.totalorder %s11, 3
    %p152 = por %p150, %p151
    %p153 = scmp.ne.s32.totalorder %s145, %s148
    %p154 = scmp.eq.s32.totalorder %s11, 0
    %p155 = por %p153, %p154
    %p156 = scmp.ne.s32.totalorder %s145, %s148
    %p157 = scmp.eq.s32.totalorder %s16, 3
    %p158 = por %p156, %p157
    %p159 = scmp.ne.s32.totalorder %s148, %s149
    %p160 = scmp.eq.s32.totalorder %s16, 0
    %p161 = por %p159, %p160
    %p162 = scmp.ne.s32.totalorder %s148, %s149
    %p163 = scmp.eq.s32.totalorder %s17, 3
    %p164 = por %p162, %p163
    %p166 = scmp.ne.s32.totalorder %s149, %s165
    %p167 = scmp.eq.s32.totalorder %s17, 0
    %p168 = por %p166, %p167
    %p169 = scmp.le.s32.totalorder 1, %s11
    %p170 = scmp.lt.s32.totalorder %s11, 5
    %p171 = pnand %p169, %p170
    %p172 = pneg %p171
    // Predicated region
    $region9: #{pointnet_forward.2} parent=5 // pred_check
      _
    $region10: #{pointnet_forward.2} parent=5 // pred_check_branch
      %174 = sbr.rel (%p171) target = $region12
    $region11: #{pointnet_forward.2} parent=5 // pred_region
      %s175 = ssub.s32 %s11, 1
      // Predicated region
      $region13: #{pointnet_forward.2} parent=11 // pred_check
        %p176 = pneg %p72
      $region14: #{pointnet_forward.2} parent=11 // pred_check_branch
        %178 = sbr.rel (%p176) target = $region16
      $region15: #{pointnet_forward.2} parent=11 // pred_region
        _
      $region16: #{pointnet_forward.2} parent=11 // pred_fallthru
        _
      // Predicated region
      $region17: #{pointnet_forward.2} parent=11 // pred_check
        %p179 = pneg %p93
      $region18: #{pointnet_forward.2} parent=11 // pred_check_branch
        %181 = sbr.rel (%p179) target = $region20
      $region19: #{pointnet_forward.2} parent=11 // pred_region
        _
      $region20: #{pointnet_forward.2} parent=11 // pred_fallthru
        _
      // Predicated region
      $region21: #{pointnet_forward.2} parent=11 // pred_check
        %p182 = pneg %p114
      $region22: #{pointnet_forward.2} parent=11 // pred_check_branch
        %184 = sbr.rel (%p182) target = $region24
      $region23: #{pointnet_forward.2} parent=11 // pred_region
        _
      $region24: #{pointnet_forward.2} parent=11 // pred_fallthru
        _
      // Predicated region
      $region25: #{pointnet_forward.2} parent=11 // pred_check
        %p185 = pneg %p135
      $region26: #{pointnet_forward.2} parent=11 // pred_check_branch
        %187 = sbr.rel (%p185) target = $region28
      $region27: #{pointnet_forward.2} parent=11 // pred_region
        _
      $region28: #{pointnet_forward.2} parent=11 // pred_fallthru
        _
    $region12: #{pointnet_forward.2} parent=5 // pred_fallthru
      _
    %p188 = scmp.lt.s32.totalorder %s11, 4
    // Predicated region
    $region29: #{pointnet_forward.2} parent=5 // pred_check
      %p189 = pneg %p188
    $region30: #{pointnet_forward.2} parent=5 // pred_check_branch
      %191 = sbr.rel (%p189) target = $region32
    $region31: #{pointnet_forward.2} parent=5 // pred_region
      // Predicated region
      $region33: #{pointnet_forward.2} parent=31 // pred_check
        %p192 = pneg %p45
      $region34: #{pointnet_forward.2} parent=31 // pred_check_branch
        %194 = sbr.rel (%p192) target = $region36
      $region35: #{pointnet_forward.2} parent=31 // pred_region
        %s195 = smul.u32 16, %s19
        %p196 = scmp.lt.s32.totalorder %s18, 1
        %s197 = scalar_select %p196, %s18, 1
        %p198 = scmp.lt.s32.totalorder %s195, 31
        %s199 = scalar_select %p198, %s195, 31
        %s200 = smul.addr %s197, 32
        %s201 = sadd.s32 %s199, %s200
        %s202 = smul.addr %s201, 8
        %s203 = scalar_lea.vmem %s0, %s202
        %s204 = smul.u32 16, %s19
      $region36: #{pointnet_forward.2} parent=31 // pred_fallthru
        _
    $region32: #{pointnet_forward.2} parent=5 // pred_fallthru
      _
    %p205 = scmp.le.s32.totalorder 1, %s11
    %p206 = scmp.lt.s32.totalorder %s11, 5
    %p207 = pnand %p205, %p206
    %p208 = pneg %p207
    // Predicated region
    $region37: #{pointnet_forward.2} parent=5 // pred_check
      _
    $region38: #{pointnet_forward.2} parent=5 // pred_check_branch
      %210 = sbr.rel (%p207) target = $region40
    $region39: #{pointnet_forward.2} parent=5 // pred_region
      %s211 = ssub.s32 %s11, 1
      %s212 = smul.u32 16, %s21
      %p213 = scmp.lt.s32.totalorder %s20, 1
      %s214 = scalar_select %p213, %s20, 1
      %p215 = scmp.lt.s32.totalorder %s212, 31
      %s216 = scalar_select %p215, %s212, 31
      %s217 = smul.addr %s214, 32
      %s218 = sadd.s32 %s216, %s217
      %s219 = smul.addr %s218, 8
      %s220 = scalar_lea.vmem %s0, %s219
      %p221 = pneg %p51
      %p222 = pneg %p48
      %p223 = pneg %p72
      %p224 = pneg %p69
      %p225 = pneg %p93
      %p226 = pneg %p90
      %p227 = pneg %p114
      %p228 = pneg %p111
      %p229 = pneg %p135
      %p230 = pneg %p132
      %p231 = pneg %p161
      %p232 = pneg %p158
      %p233 = scmp.lt.s32.totalorder %s20, 1
      %s234 = scalar_select %p233, %s20, 1
      %s235 = scalar_lea.vmem %s5, %s234
      %s236 = smul.u32 16, %s21
      %p237 = scmp.lt.s32.totalorder %s20, 1
      %s238 = scalar_select %p237, %s20, 1
      %p239 = scmp.lt.s32.totalorder %s236, 31
      %s240 = scalar_select %p239, %s236, 31
      %s241 = smul.addr %s238, 32
      %s242 = sadd.s32 %s240, %s241
      %s243 = smul.addr %s242, 8
      %s244 = scalar_lea.vmem %s0, %s243
      %s245 = smul.u32 16, %s21
      %p246 = scmp.lt.s32.totalorder %s20, 1
      %s247 = scalar_select %p246, %s20, 1
      %s248 = scalar_lea.vmem %s5, %s247
      %p249 = scmp.eq.s32.totalorder %s21, 0
      // Predicated region
      $region41: #{pointnet_forward.2} parent=39 // pred_check
        %p250 = pneg %p249
      $region42: #{pointnet_forward.2} parent=39 // pred_check_branch
        %252 = sbr.rel (%p250) target = $region44
      $region43: #{pointnet_forward.2} parent=39 // pred_region
        %253 = vst [vmem:[#allocation2] sm:$0x1] -inf
      $region44: #{pointnet_forward.2} parent=39 // pred_fallthru
        _
      %v254 = vld [vmem:[%s244] sm:$0xff]
      %v255 = vld [vmem:[%s244 + $0x8] sm:$0xff]
      %v256 = vld [vmem:[%s244 + $0x10] sm:$0xff]
      %v257 = vld [vmem:[%s244 + $0x18] sm:$0xff]
      %v258 = vld [vmem:[%s244 + $0x20] sm:$0xff]
      %v259 = vld [vmem:[%s244 + $0x28] sm:$0xff]
      %v260 = vld [vmem:[%s244 + $0x30] sm:$0xff]
      %v261 = vld [vmem:[%s244 + $0x38] sm:$0xff]
      %v262 = vld [vmem:[%s244 + $0x40] sm:$0xff]
      %v263 = vld [vmem:[%s244 + $0x48] sm:$0xff]
      %v264 = vld [vmem:[%s244 + $0x50] sm:$0xff]
      %v265 = vld [vmem:[%s244 + $0x58] sm:$0xff]
      %v266 = vld [vmem:[%s244 + $0x60] sm:$0xff]
      %v267 = vld [vmem:[%s244 + $0x68] sm:$0xff]
      %v268 = vld [vmem:[%s244 + $0x70] sm:$0xff]
      %v269 = vld [vmem:[%s244 + $0x78] sm:$0xff]
      %v270 = vld [vmem:[%s1] sm:$0x7]
      %v271 = vld [vmem:[%s2] sm:$0x1]
      %v273 = vlaneseq
      %v274 = vshrl.u32 %v273, 7
      %v275 = vsub.s32 0, %v274
      %v276 = vrot.slane %v271, %v275
      %vm278 = vcmask 23552
      %v280 = vsel %vm278, %v254, 0
      %v283 = vsel %vm278, %v255, 0
      %v286 = vsel %vm278, %v256, 0
      %v289 = vsel %vm278, %v257, 0
      %v292 = vsel %vm278, %v258, 0
      %v295 = vsel %vm278, %v259, 0
      %v298 = vsel %vm278, %v260, 0
      %v301 = vsel %vm278, %v261, 0
      %v304 = vsel %vm278, %v262, 0
      %v307 = vsel %vm278, %v263, 0
      %v310 = vsel %vm278, %v264, 0
      %v313 = vsel %vm278, %v265, 0
      %v316 = vsel %vm278, %v266, 0
      %v319 = vsel %vm278, %v267, 0
      %v322 = vsel %vm278, %v268, 0
      %v325 = vsel %vm278, %v269, 0
      %vm327 = vcmask 1042432
      %v329 = vsel %vm327, %v270, 0
      %331 = vmatprep.subr.mxu0 0.0
      %332 = vmatpush1.msra.mxu0 %v329
      %333 = vmatprep.subr.mxu0 0.0
      %334 = vmatpush1.msra.mxu0 0.0
      %335 = vmatprep.subr.mxu0 0.0
      %336 = vmatpush1.msra.mxu0 0.0
      %337 = vmatprep.subr.mxu0 0.0
      %338 = vmatpush1.msra.mxu0 0.0
      %339 = vmatprep.subr.mxu0 0.0
      %340 = vmatpush1.msra.mxu0 0.0
      %341 = vmatprep.subr.mxu0 0.0
      %342 = vmatpush1.msra.mxu0 0.0
      %343 = vmatprep.subr.mxu0 0.0
      %344 = vmatpush1.msra.mxu0 0.0
      %345 = vmatprep.subr.mxu0 0.0
      %346 = vmatpush1.msra.mxu0 0.0
      %347 = vmatprep.subr.mxu0 0.0
      %348 = vmatpush1.msra.mxu0 0.0
      %349 = vmatprep.subr.mxu0 0.0
      %350 = vmatpush1.msra.mxu0 0.0
      %351 = vmatprep.subr.mxu0 0.0
      %352 = vmatpush1.msra.mxu0 0.0
      %353 = vmatprep.subr.mxu0 0.0
      %354 = vmatpush1.msra.mxu0 0.0
      %355 = vmatprep.subr.mxu0 0.0
      %356 = vmatpush1.msra.mxu0 0.0
      %357 = vmatprep.subr.mxu0 0.0
      %358 = vmatpush1.msra.mxu0 0.0
      %359 = vmatprep.subr.mxu0 0.0
      %360 = vmatpush1.msra.mxu0 0.0
      %361 = vmatprep.subr.mxu0 0.0
      %362 = vmatpush1.msra.mxu0 0.0
      %363 = vmatprep.subr.mxu0 0.0
      %364 = vmatpush1.msra.mxu0 0.0
      %365 = vmatprep.subr.mxu0 0.0
      %366 = vmatpush1.msra.mxu0 0.0
      %367 = vmatprep.subr.mxu0 0.0
      %368 = vmatpush1.msra.mxu0 0.0
      %369 = vmatprep.subr.mxu0 0.0
      %370 = vmatpush1.msra.mxu0 0.0
      %371 = vmatprep.subr.mxu0 0.0
      %372 = vmatpush1.msra.mxu0 0.0
      %373 = vmatprep.subr.mxu0 0.0
      %374 = vmatpush1.msra.mxu0 0.0
      %375 = vmatprep.subr.mxu0 0.0
      %376 = vmatpush1.msra.mxu0 0.0
      %377 = vmatprep.subr.mxu0 0.0
      %378 = vmatpush1.msra.mxu0 0.0
      %379 = vmatprep.subr.mxu0 0.0
      %380 = vmatpush1.msra.mxu0 0.0
      %381 = vmatprep.subr.mxu0 0.0
      %382 = vmatpush1.msra.mxu0 0.0
      %383 = vmatprep.subr.mxu0 0.0
      %384 = vmatpush1.msra.mxu0 0.0
      %385 = vmatprep.subr.mxu0 0.0
      %386 = vmatpush1.msra.mxu0 0.0
      %387 = vmatprep.subr.mxu0 0.0
      %388 = vmatpush1.msra.mxu0 0.0
      %389 = vmatprep.subr.mxu0 0.0
      %390 = vmatpush1.msra.mxu0 0.0
      %391 = vmatprep.subr.mxu0 0.0
      %392 = vmatpush1.msra.mxu0 0.0
      %393 = vmatprep.subr.mxu0 0.0
      %394 = vmatpush1.msra.mxu0 0.0
      %395 = vmatprep.mubr.f32.mxu0 0.0
      %396 = vmatmul.mubr.f32.gmra.mrb[0].mxu0 %v280
      %v397 = vpop.f32.mrb[0].mxu0
      %v398 = vadd.f32 %v276, %v397
      %v399 = vpop.f32.mrb[0].mxu0
      %400 = vmatprep.mubr.f32.mxu0 0.0
      %401 = vmatmul.mubr.f32.gmra.mrb[0].mxu0 %v283
      %v402 = vpop.f32.mrb[0].mxu0
      %v403 = vadd.f32 %v276, %v402
      %v404 = vpop.f32.mrb[0].mxu0
      %405 = vmatprep.mubr.f32.mxu0 0.0
      %406 = vmatmul.mubr.f32.gmra.mrb[0].mxu0 %v286
      %v407 = vpop.f32.mrb[0].mxu0
      %v408 = vadd.f32 %v276, %v407
      %v409 = vpop.f32.mrb[0].mxu0
      %410 = vmatprep.mubr.f32.mxu0 0.0
      %411 = vmatmul.mubr.f32.gmra.mrb[0].mxu0 %v289
      %v412 = vpop.f32.mrb[0].mxu0
      %v413 = vadd.f32 %v276, %v412
      %v414 = vpop.f32.mrb[0].mxu0
      %415 = vmatprep.mubr.f32.mxu0 0.0
      %416 = vmatmul.mubr.f32.gmra.mrb[0].mxu0 %v292
      %v417 = vpop.f32.mrb[0].mxu0
      %v418 = vadd.f32 %v276, %v417
      %v419 = vpop.f32.mrb[0].mxu0
      %420 = vmatprep.mubr.f32.mxu0 0.0
      %421 = vmatmul.mubr.f32.gmra.mrb[0].mxu0 %v295
      %v422 = vpop.f32.mrb[0].mxu0
      %v423 = vadd.f32 %v276, %v422
      %v424 = vpop.f32.mrb[0].mxu0
      %425 = vmatprep.mubr.f32.mxu0 0.0
      %426 = vmatmul.mubr.f32.gmra.mrb[0].mxu0 %v298
      %v427 = vpop.f32.mrb[0].mxu0
      %v428 = vadd.f32 %v276, %v427
      %v429 = vpop.f32.mrb[0].mxu0
      %430 = vmatprep.mubr.f32.mxu0 0.0
      %431 = vmatmul.mubr.f32.gmra.mrb[0].mxu0 %v301
      %v432 = vpop.f32.mrb[0].mxu0
      %v433 = vadd.f32 %v276, %v432
      %v434 = vpop.f32.mrb[0].mxu0
      %435 = vmatprep.mubr.f32.mxu0 0.0
      %436 = vmatmul.mubr.f32.gmra.mrb[0].mxu0 %v304
      %v437 = vpop.f32.mrb[0].mxu0
      %v438 = vadd.f32 %v276, %v437
      %v439 = vpop.f32.mrb[0].mxu0
      %440 = vmatprep.mubr.f32.mxu0 0.0
      %441 = vmatmul.mubr.f32.gmra.mrb[0].mxu0 %v307
      %v442 = vpop.f32.mrb[0].mxu0
      %v443 = vadd.f32 %v276, %v442
      %v444 = vpop.f32.mrb[0].mxu0
      %445 = vmatprep.mubr.f32.mxu0 0.0
      %446 = vmatmul.mubr.f32.gmra.mrb[0].mxu0 %v310
      %v447 = vpop.f32.mrb[0].mxu0
      %v448 = vadd.f32 %v276, %v447
      %v449 = vpop.f32.mrb[0].mxu0
      %450 = vmatprep.mubr.f32.mxu0 0.0
      %451 = vmatmul.mubr.f32.gmra.mrb[0].mxu0 %v313
      %v452 = vpop.f32.mrb[0].mxu0
      %v453 = vadd.f32 %v276, %v452
      %v454 = vpop.f32.mrb[0].mxu0
      %455 = vmatprep.mubr.f32.mxu0 0.0
      %456 = vmatmul.mubr.f32.gmra.mrb[0].mxu0 %v316
      %v457 = vpop.f32.mrb[0].mxu0
      %v458 = vadd.f32 %v276, %v457
      %v459 = vpop.f32.mrb[0].mxu0
      %460 = vmatprep.mubr.f32.mxu0 0.0
      %461 = vmatmul.mubr.f32.gmra.mrb[0].mxu0 %v319
      %v462 = vpop.f32.mrb[0].mxu0
      %v463 = vadd.f32 %v276, %v462
      %v464 = vpop.f32.mrb[0].mxu0
      %465 = vmatprep.mubr.f32.mxu0 0.0
      %466 = vmatmul.mubr.f32.gmra.mrb[0].mxu0 %v322
      %v467 = vpop.f32.mrb[0].mxu0
      %v468 = vadd.f32 %v276, %v467
      %v469 = vpop.f32.mrb[0].mxu0
      %470 = vmatprep.mubr.f32.mxu0 0.0
      %471 = vmatmul.mubr.f32.gmra.mrb[0].mxu0 %v325
      %v472 = vpop.f32.mrb[0].mxu0
      %v473 = vadd.f32 %v276, %v472
      %v474 = vpop.f32.mrb[0].mxu0
      %475 = vdwg.mxu0
      %v476 = vmax.f32 %v398, 0.0
      %v477 = vmax.f32 %v403, 0.0
      %v478 = vmax.f32 %v408, 0.0
      %v479 = vmax.f32 %v413, 0.0
      %v480 = vmax.f32 %v418, 0.0
      %v481 = vmax.f32 %v423, 0.0
      %v482 = vmax.f32 %v428, 0.0
      %v483 = vmax.f32 %v433, 0.0
      %v484 = vmax.f32 %v438, 0.0
      %v485 = vmax.f32 %v443, 0.0
      %v486 = vmax.f32 %v448, 0.0
      %v487 = vmax.f32 %v453, 0.0
      %v488 = vmax.f32 %v458, 0.0
      %v489 = vmax.f32 %v463, 0.0
      %v490 = vmax.f32 %v468, 0.0
      %v491 = vmax.f32 %v473, 0.0
      %v492 = vld [vmem:[%s3] sm:$0xff]
      %v493 = vld [vmem:[%s3 + $0x8] sm:$0xff]
      %v494 = vld [vmem:[%s3 + $0x10] sm:$0xff]
      %v495 = vld [vmem:[%s3 + $0x18] sm:$0xff]
      %v496 = vld [vmem:[%s3 + $0x20] sm:$0xff]
      %v497 = vld [vmem:[%s3 + $0x28] sm:$0xff]
      %v498 = vld [vmem:[%s3 + $0x30] sm:$0xff]
      %v499 = vld [vmem:[%s3 + $0x38] sm:$0xff]
      %v500 = vld [vmem:[%s4] sm:$0x1]
      %v502 = vlaneseq
      %v503 = vshrl.u32 %v502, 7
      %v504 = vsub.s32 0, %v503
      %v505 = vrot.slane %v500, %v504
      %vm507 = vcmask 523264
      %v509 = vsel %vm507, %v476, 0
      %v512 = vsel %vm507, %v477, 0
      %v515 = vsel %vm507, %v478, 0
      %v518 = vsel %vm507, %v479, 0
      %v521 = vsel %vm507, %v480, 0
      %v524 = vsel %vm507, %v481, 0
      %v527 = vsel %vm507, %v482, 0
      %v530 = vsel %vm507, %v483, 0
      %v533 = vsel %vm507, %v484, 0
      %v536 = vsel %vm507, %v485, 0
      %v539 = vsel %vm507, %v486, 0
      %v542 = vsel %vm507, %v487, 0
      %v545 = vsel %vm507, %v488, 0
      %v548 = vsel %vm507, %v489, 0
      %v551 = vsel %vm507, %v490, 0
      %v554 = vsel %vm507, %v491, 0
      %556 = vmatprep.subr.mxu0 0.0
      %557 = vmatpush1.msra.mxu0 %v492
      %558 = vmatprep.subr.mxu0 0.0
      %559 = vmatpush1.msra.mxu0 %v493
      %560 = vmatprep.subr.mxu0 0.0
      %561 = vmatpush1.msra.mxu0 %v494
      %562 = vmatprep.subr.mxu0 0.0
      %563 = vmatpush1.msra.mxu0 %v495
      %564 = vmatprep.subr.mxu0 0.0
      %565 = vmatpush1.msra.mxu0 %v496
      %566 = vmatprep.subr.mxu0 0.0
      %567 = vmatpush1.msra.mxu0 %v497
      %568 = vmatprep.subr.mxu0 0.0
      %569 = vmatpush1.msra.mxu0 %v498
      %570 = vmatprep.subr.mxu0 0.0
      %571 = vmatpush1.msra.mxu0 %v499
      %572 = vmatprep.subr.mxu0 0.0
      %573 = vmatpush1.msra.mxu0 0.0
      %574 = vmatprep.subr.mxu0 0.0
      %575 = vmatpush1.msra.mxu0 0.0
      %576 = vmatprep.subr.mxu0 0.0
      %577 = vmatpush1.msra.mxu0 0.0
      %578 = vmatprep.subr.mxu0 0.0
      %579 = vmatpush1.msra.mxu0 0.0
      %580 = vmatprep.subr.mxu0 0.0
      %581 = vmatpush1.msra.mxu0 0.0
      %582 = vmatprep.subr.mxu0 0.0
      %583 = vmatpush1.msra.mxu0 0.0
      %584 = vmatprep.subr.mxu0 0.0
      %585 = vmatpush1.msra.mxu0 0.0
      %586 = vmatprep.subr.mxu0 0.0
      %587 = vmatpush1.msra.mxu0 0.0
      %588 = vmatprep.subr.mxu0 0.0
      %589 = vmatpush1.msra.mxu0 0.0
      %590 = vmatprep.subr.mxu0 0.0
      %591 = vmatpush1.msra.mxu0 0.0
      %592 = vmatprep.subr.mxu0 0.0
      %593 = vmatpush1.msra.mxu0 0.0
      %594 = vmatprep.subr.mxu0 0.0
      %595 = vmatpush1.msra.mxu0 0.0
      %596 = vmatprep.subr.mxu0 0.0
      %597 = vmatpush1.msra.mxu0 0.0
      %598 = vmatprep.subr.mxu0 0.0
      %599 = vmatpush1.msra.mxu0 0.0
      %600 = vmatprep.subr.mxu0 0.0
      %601 = vmatpush1.msra.mxu0 0.0
      %602 = vmatprep.subr.mxu0 0.0
      %603 = vmatpush1.msra.mxu0 0.0
      %604 = vmatprep.subr.mxu0 0.0
      %605 = vmatpush1.msra.mxu0 0.0
      %606 = vmatprep.subr.mxu0 0.0
      %607 = vmatpush1.msra.mxu0 0.0
      %608 = vmatprep.subr.mxu0 0.0
      %609 = vmatpush1.msra.mxu0 0.0
      %610 = vmatprep.subr.mxu0 0.0
      %611 = vmatpush1.msra.mxu0 0.0
      %612 = vmatprep.subr.mxu0 0.0
      %613 = vmatpush1.msra.mxu0 0.0
      %614 = vmatprep.subr.mxu0 0.0
      %615 = vmatpush1.msra.mxu0 0.0
      %616 = vmatprep.subr.mxu0 0.0
      %617 = vmatpush1.msra.mxu0 0.0
      %618 = vmatprep.subr.mxu0 0.0
      %619 = vmatpush1.msra.mxu0 0.0
      %620 = vmatprep.mubr.f32.mxu0 0.0
      %621 = vmatmul.mubr.f32.gmra.mrb[0].mxu0 %v509
      %v622 = vpop.f32.mrb[0].mxu0
      %v623 = vadd.f32 %v505, %v622
      %v624 = vpop.f32.mrb[0].mxu0
      %625 = vmatprep.mubr.f32.mxu0 0.0
      %626 = vmatmul.mubr.f32.gmra.mrb[0].mxu0 %v512
      %v627 = vpop.f32.mrb[0].mxu0
      %v628 = vadd.f32 %v505, %v627
      %v629 = vpop.f32.mrb[0].mxu0
      %630 = vmatprep.mubr.f32.mxu0 0.0
      %631 = vmatmul.mubr.f32.gmra.mrb[0].mxu0 %v515
      %v632 = vpop.f32.mrb[0].mxu0
      %v633 = vadd.f32 %v505, %v632
      %v634 = vpop.f32.mrb[0].mxu0
      %635 = vmatprep.mubr.f32.mxu0 0.0
      %636 = vmatmul.mubr.f32.gmra.mrb[0].mxu0 %v518
      %v637 = vpop.f32.mrb[0].mxu0
      %v638 = vadd.f32 %v505, %v637
      %v639 = vpop.f32.mrb[0].mxu0
      %640 = vmatprep.mubr.f32.mxu0 0.0
      %641 = vmatmul.mubr.f32.gmra.mrb[0].mxu0 %v521
      %v642 = vpop.f32.mrb[0].mxu0
      %v643 = vadd.f32 %v505, %v642
      %v644 = vpop.f32.mrb[0].mxu0
      %645 = vmatprep.mubr.f32.mxu0 0.0
      %646 = vmatmul.mubr.f32.gmra.mrb[0].mxu0 %v524
      %v647 = vpop.f32.mrb[0].mxu0
      %v648 = vadd.f32 %v505, %v647
      %v649 = vpop.f32.mrb[0].mxu0
      %650 = vmatprep.mubr.f32.mxu0 0.0
      %651 = vmatmul.mubr.f32.gmra.mrb[0].mxu0 %v527
      %v652 = vpop.f32.mrb[0].mxu0
      %v653 = vadd.f32 %v505, %v652
      %v654 = vpop.f32.mrb[0].mxu0
      %655 = vmatprep.mubr.f32.mxu0 0.0
      %656 = vmatmul.mubr.f32.gmra.mrb[0].mxu0 %v530
      %v657 = vpop.f32.mrb[0].mxu0
      %v658 = vadd.f32 %v505, %v657
      %v659 = vpop.f32.mrb[0].mxu0
      %660 = vmatprep.mubr.f32.mxu0 0.0
      %661 = vmatmul.mubr.f32.gmra.mrb[0].mxu0 %v533
      %v662 = vpop.f32.mrb[0].mxu0
      %v663 = vadd.f32 %v505, %v662
      %v664 = vpop.f32.mrb[0].mxu0
      %665 = vmatprep.mubr.f32.mxu0 0.0
      %666 = vmatmul.mubr.f32.gmra.mrb[0].mxu0 %v536
      %v667 = vpop.f32.mrb[0].mxu0
      %v668 = vadd.f32 %v505, %v667
      %v669 = vpop.f32.mrb[0].mxu0
      %670 = vmatprep.mubr.f32.mxu0 0.0
      %671 = vmatmul.mubr.f32.gmra.mrb[0].mxu0 %v539
      %v672 = vpop.f32.mrb[0].mxu0
      %v673 = vadd.f32 %v505, %v672
      %v674 = vpop.f32.mrb[0].mxu0
      %675 = vmatprep.mubr.f32.mxu0 0.0
      %676 = vmatmul.mubr.f32.gmra.mrb[0].mxu0 %v542
      %v677 = vpop.f32.mrb[0].mxu0
      %v678 = vadd.f32 %v505, %v677
      %v679 = vpop.f32.mrb[0].mxu0
      %680 = vmatprep.mubr.f32.mxu0 0.0
      %681 = vmatmul.mubr.f32.gmra.mrb[0].mxu0 %v545
      %v682 = vpop.f32.mrb[0].mxu0
      %v683 = vadd.f32 %v505, %v682
      %v684 = vpop.f32.mrb[0].mxu0
      %685 = vmatprep.mubr.f32.mxu0 0.0
      %686 = vmatmul.mubr.f32.gmra.mrb[0].mxu0 %v548
      %v687 = vpop.f32.mrb[0].mxu0
      %v688 = vadd.f32 %v505, %v687
      %v689 = vpop.f32.mrb[0].mxu0
      %690 = vmatprep.mubr.f32.mxu0 0.0
      %691 = vmatmul.mubr.f32.gmra.mrb[0].mxu0 %v551
      %v692 = vpop.f32.mrb[0].mxu0
      %v693 = vadd.f32 %v505, %v692
      %v694 = vpop.f32.mrb[0].mxu0
      %695 = vmatprep.mubr.f32.mxu0 0.0
      %696 = vmatmul.mubr.f32.gmra.mrb[0].mxu0 %v554
      %v697 = vpop.f32.mrb[0].mxu0
      %v698 = vadd.f32 %v505, %v697
      %v699 = vpop.f32.mrb[0].mxu0
      %700 = vdwg.mxu0
      %v701 = vmax.f32 %v623, 0.0
      %v702 = vmax.f32 %v628, 0.0
      %v703 = vmax.f32 %v633, 0.0
      %v704 = vmax.f32 %v638, 0.0
      %v705 = vmax.f32 %v643, 0.0
      %v706 = vmax.f32 %v648, 0.0
      %v707 = vmax.f32 %v653, 0.0
      %v708 = vmax.f32 %v658, 0.0
      %v709 = vmax.f32 %v663, 0.0
      %v710 = vmax.f32 %v668, 0.0
      %v711 = vmax.f32 %v673, 0.0
      %v712 = vmax.f32 %v678, 0.0
      %v713 = vmax.f32 %v683, 0.0
      %v714 = vmax.f32 %v688, 0.0
      %v715 = vmax.f32 %v693, 0.0
      %v716 = vmax.f32 %v698, 0.0
      %v717 = vld [vmem:[#allocation2] sm:$0x1]
      %v718 = vmax.f32 %v701, %v705
      %v719 = vmax.f32 %v702, %v706
      %v720 = vmax.f32 %v703, %v707
      %v721 = vmax.f32 %v704, %v708
      %v722 = vmax.f32 %v718, %v709
      %v723 = vmax.f32 %v719, %v710
      %v724 = vmax.f32 %v720, %v711
      %v725 = vmax.f32 %v721, %v712
      %v726 = vmax.f32 %v722, %v713
      %v727 = vmax.f32 %v723, %v714
      %v728 = vmax.f32 %v724, %v715
      %v729 = vmax.f32 %v725, %v716
      %v730 = vmax.f32 %v726, %v727
      %v731 = vmax.f32 %v728, %v729
      %v732 = vmax.f32 %v730, %v731
      %v733 = vrot.slane %v732, 4
      %v734 = vmax.f32 %v732, %v733
      %v735 = vrot.slane %v734, 2
      %v736 = vmax.f32 %v734, %v735
      %v737 = vrot.slane %v736, 1
      %v738 = vmax.f32 %v736, %v737
      %v739 = vmax.f32 %v717, %v738
      %740 = vst [vmem:[#allocation2] sm:$0x1] %v739
      %p741 = scmp.eq.s32.totalorder %s21, 1
      // Predicated region
      $region45: #{pointnet_forward.2} parent=39 // pred_check
        %p742 = pneg %p741
      $region46: #{pointnet_forward.2} parent=39 // pred_check_branch
        %744 = sbr.rel (%p742) target = $region48
      $region47: #{pointnet_forward.2} parent=39 // pred_region
        %v745 = vld [vmem:[#allocation2] sm:$0x1]
        %746 = vst [vmem:[%s248] sm:$0x1] %v745
      $region48: #{pointnet_forward.2} parent=39 // pred_fallthru
        _
      %p747 = scmp.lt.s32.totalorder %s20, 1
      %s748 = scalar_select %p747, %s20, 1
      %s749 = scalar_lea.vmem %s5, %s748
      // Predicated region
      $region49: #{pointnet_forward.2} parent=39 // pred_check
        %p750 = pneg %p158
      $region50: #{pointnet_forward.2} parent=39 // pred_check_branch
        %752 = sbr.rel (%p750) target = $region52
      $region51: #{pointnet_forward.2} parent=39 // pred_region
        _
      $region52: #{pointnet_forward.2} parent=39 // pred_fallthru
        _
    $region40: #{pointnet_forward.2} parent=5 // pred_fallthru
      _
    %p753 = scmp.le.s32.totalorder 2, %s11
    // Predicated region
    $region53: #{pointnet_forward.2} parent=5 // pred_check
      %p754 = pneg %p753
    $region54: #{pointnet_forward.2} parent=5 // pred_check_branch
      %756 = sbr.rel (%p754) target = $region56
    $region55: #{pointnet_forward.2} parent=5 // pred_region
      %s757 = ssub.s32 %s11, 2
      // Predicated region
      $region57: #{pointnet_forward.2} parent=55 // pred_check
        %p758 = pneg %p164
      $region58: #{pointnet_forward.2} parent=55 // pred_check_branch
        %760 = sbr.rel (%p758) target = $region60
      $region59: #{pointnet_forward.2} parent=55 // pred_region
        %p761 = scmp.lt.s32.totalorder %s22, 1
        %s762 = scalar_select %p761, %s22, 1
        %s763 = scalar_lea.vmem %s5, %s762
      $region60: #{pointnet_forward.2} parent=55 // pred_fallthru
        _
    $region56: #{pointnet_forward.2} parent=5 // pred_fallthru
      _
  $region6: #{pointnet_forward.2} parent=0 // loop_footer
    %s15 = sadd.s32 1, %s11
  $region7: #{pointnet_forward.2} parent=0 // loop_footer_branch
    %10 = sbr.rel target = $region3
  $region8: #{pointnet_forward.2} parent=0 // loop_exit
    _

// kernel: pointnet_forward.3
$region0: #{pointnet_forward.3}
  #allocation0 [shape = 'u32[]', space=smem, size = 0x4, offset = 0x4, fixed_abs, tag = 'smem constant byte address 0x4 - core index']
  #allocation1 [shape = 'u32[144,128]{1,0:T(1,128)}', space=vmem, size = 0x12000, scoped, tag = 'internal scratch']
  %s0 = inlined_call_operand.vmem [shape: f32[2,128], index: 0, kind: input, shape index: {}]
  %s1 = inlined_call_operand.vmem [shape: f32[128,256], index: 1, kind: input, shape index: {}]
  %s2 = inlined_call_operand.vmem [shape: f32[1,256], index: 2, kind: input, shape index: {}]
  %s3 = inlined_call_operand.vmem [shape: f32[256,128], index: 3, kind: input, shape index: {}]
  %s4 = inlined_call_operand.vmem [shape: f32[1,128], index: 4, kind: input, shape index: {}]
  %s5 = inlined_call_operand.hbm [shape: f32[2,128], index: 5, kind: output, shape index: {}]
  %s6 = sld [smem:[#allocation0]]
  $region30: #{pointnet_forward.3} parent=0
    _
  %s8 = ssub.s32 1, %s6
  %s9 = scalar_select 0, %s8, %s6
  $region1: #{pointnet_forward.3} parent=0
    #allocation2 [shape = 'u8[1024]{0}', space=vmem, size = 0x400, scoped, tag = 'output window, operand 0, single buffered']
    #allocation3 [shape = 's32[1]{0}', space=sflag, size = 0x4, scoped, tag = 'scoped memory for pointnet_forward.3']
    %10 = vsyncpa [#allocation3], 0
    // Predicated region
    $region2: #{pointnet_forward.3} parent=1 // pred_check
      _
    $region3: #{pointnet_forward.3} parent=1 // pred_check_branch
      %12 = sbr.rel (0) target = $region5
    $region4: #{pointnet_forward.3} parent=1 // pred_region
      _
    $region5: #{pointnet_forward.3} parent=1 // pred_fallthru
      _
    // Predicated region
    $region6: #{pointnet_forward.3} parent=1 // pred_check
      _
    $region7: #{pointnet_forward.3} parent=1 // pred_check_branch
      %14 = sbr.rel (0) target = $region9
    $region8: #{pointnet_forward.3} parent=1 // pred_region
      _
    $region9: #{pointnet_forward.3} parent=1 // pred_fallthru
      _
    // Predicated region
    $region10: #{pointnet_forward.3} parent=1 // pred_check
      _
    $region11: #{pointnet_forward.3} parent=1 // pred_check_branch
      %16 = sbr.rel (0) target = $region13
    $region12: #{pointnet_forward.3} parent=1 // pred_region
      _
    $region13: #{pointnet_forward.3} parent=1 // pred_fallthru
      _
    // Predicated region
    $region14: #{pointnet_forward.3} parent=1 // pred_check
      _
    $region15: #{pointnet_forward.3} parent=1 // pred_check_branch
      %18 = sbr.rel (0) target = $region17
    $region16: #{pointnet_forward.3} parent=1 // pred_region
      _
    $region17: #{pointnet_forward.3} parent=1 // pred_fallthru
      _
    // Predicated region
    $region18: #{pointnet_forward.3} parent=1 // pred_check
      _
    $region19: #{pointnet_forward.3} parent=1 // pred_check_branch
      %20 = sbr.rel (0) target = $region21
    $region20: #{pointnet_forward.3} parent=1 // pred_region
      _
    $region21: #{pointnet_forward.3} parent=1 // pred_fallthru
      _
    %v21 = vld [vmem:[%s0] sm:$0x3]
    %v22 = vld [vmem:[%s1] sm:$0xff]
    %v23 = vld [vmem:[%s1 + $0x8] sm:$0xff]
    %v24 = vld [vmem:[%s1 + $0x10] sm:$0xff]
    %v25 = vld [vmem:[%s1 + $0x18] sm:$0xff]
    %v26 = vld [vmem:[%s1 + $0x20] sm:$0xff]
    %v27 = vld [vmem:[%s1 + $0x28] sm:$0xff]
    %v28 = vld [vmem:[%s1 + $0x30] sm:$0xff]
    %v29 = vld [vmem:[%s1 + $0x38] sm:$0xff]
    %v30 = vld [vmem:[%s1 + $0x40] sm:$0xff]
    %v31 = vld [vmem:[%s1 + $0x48] sm:$0xff]
    %v32 = vld [vmem:[%s1 + $0x50] sm:$0xff]
    %v33 = vld [vmem:[%s1 + $0x58] sm:$0xff]
    %v34 = vld [vmem:[%s1 + $0x60] sm:$0xff]
    %v35 = vld [vmem:[%s1 + $0x68] sm:$0xff]
    %v36 = vld [vmem:[%s1 + $0x70] sm:$0xff]
    %v37 = vld [vmem:[%s1 + $0x78] sm:$0xff]
    %v38 = vld [vmem:[%s1 + $0x80] sm:$0xff]
    %v39 = vld [vmem:[%s1 + $0x88] sm:$0xff]
    %v40 = vld [vmem:[%s1 + $0x90] sm:$0xff]
    %v41 = vld [vmem:[%s1 + $0x98] sm:$0xff]
    %v42 = vld [vmem:[%s1 + $0xa0] sm:$0xff]
    %v43 = vld [vmem:[%s1 + $0xa8] sm:$0xff]
    %v44 = vld [vmem:[%s1 + $0xb0] sm:$0xff]
    %v45 = vld [vmem:[%s1 + $0xb8] sm:$0xff]
    %v46 = vld [vmem:[%s1 + $0xc0] sm:$0xff]
    %v47 = vld [vmem:[%s1 + $0xc8] sm:$0xff]
    %v48 = vld [vmem:[%s1 + $0xd0] sm:$0xff]
    %v49 = vld [vmem:[%s1 + $0xd8] sm:$0xff]
    %v50 = vld [vmem:[%s1 + $0xe0] sm:$0xff]
    %v51 = vld [vmem:[%s1 + $0xe8] sm:$0xff]
    %v52 = vld [vmem:[%s1 + $0xf0] sm:$0xff]
    %v53 = vld [vmem:[%s1 + $0xf8] sm:$0xff]
    %v54 = vld [vmem:[%s2] sm:$0x3]
    %v56 = vlaneseq
    %v57 = vshrl.u32 %v56, 7
    %v58 = vsub.s32 0, %v57
    %v59 = vrot.slane %v54, %v58
    %v60 = vlaneseq
    %v61 = vshrl.u32 %v60, 7
    %v62 = vsub.s32 1, %v61
    %v63 = vrot.slane %v54, %v62
    %66 = vmatprep.subr.mxu0 %v23
    %67 = vmatpush1.msra.mxu0 %v22
    %68 = vmatprep.subr.mxu0 %v25
    %69 = vmatpush1.msra.mxu0 %v24
    %70 = vmatprep.subr.mxu0 %v27
    %71 = vmatpush1.msra.mxu0 %v26
    %72 = vmatprep.subr.mxu0 %v29
    %73 = vmatpush1.msra.mxu0 %v28
    %74 = vmatprep.subr.mxu0 %v31
    %75 = vmatpush1.msra.mxu0 %v30
    %76 = vmatprep.subr.mxu0 %v33
    %77 = vmatpush1.msra.mxu0 %v32
    %78 = vmatprep.subr.mxu0 %v35
    %79 = vmatpush1.msra.mxu0 %v34
    %80 = vmatprep.subr.mxu0 %v37
    %81 = vmatpush1.msra.mxu0 %v36
    %82 = vmatprep.subr.mxu0 %v39
    %83 = vmatpush1.msra.mxu0 %v38
    %84 = vmatprep.subr.mxu0 %v41
    %85 = vmatpush1.msra.mxu0 %v40
    %86 = vmatprep.subr.mxu0 %v43
    %87 = vmatpush1.msra.mxu0 %v42
    %88 = vmatprep.subr.mxu0 %v45
    %89 = vmatpush1.msra.mxu0 %v44
    %90 = vmatprep.subr.mxu0 %v47
    %91 = vmatpush1.msra.mxu0 %v46
    %92 = vmatprep.subr.mxu0 %v49
    %93 = vmatpush1.msra.mxu0 %v48
    %94 = vmatprep.subr.mxu0 %v51
    %95 = vmatpush1.msra.mxu0 %v50
    %96 = vmatprep.subr.mxu0 %v53
    %97 = vmatpush1.msra.mxu0 %v52
    %98 = vmatprep.subr.mxu0 0.0
    %99 = vmatpush1.msra.mxu0 0.0
    %100 = vmatprep.subr.mxu0 0.0
    %101 = vmatpush1.msra.mxu0 0.0
    %102 = vmatprep.subr.mxu0 0.0
    %103 = vmatpush1.msra.mxu0 0.0
    %104 = vmatprep.subr.mxu0 0.0
    %105 = vmatpush1.msra.mxu0 0.0
    %106 = vmatprep.subr.mxu0 0.0
    %107 = vmatpush1.msra.mxu0 0.0
    %108 = vmatprep.subr.mxu0 0.0
    %109 = vmatpush1.msra.mxu0 0.0
    %110 = vmatprep.subr.mxu0 0.0
    %111 = vmatpush1.msra.mxu0 0.0
    %112 = vmatprep.subr.mxu0 0.0
    %113 = vmatpush1.msra.mxu0 0.0
    %114 = vmatprep.subr.mxu0 0.0
    %115 = vmatpush1.msra.mxu0 0.0
    %116 = vmatprep.subr.mxu0 0.0
    %117 = vmatpush1.msra.mxu0 0.0
    %118 = vmatprep.subr.mxu0 0.0
    %119 = vmatpush1.msra.mxu0 0.0
    %120 = vmatprep.subr.mxu0 0.0
    %121 = vmatpush1.msra.mxu0 0.0
    %122 = vmatprep.subr.mxu0 0.0
    %123 = vmatpush1.msra.mxu0 0.0
    %124 = vmatprep.subr.mxu0 0.0
    %125 = vmatpush1.msra.mxu0 0.0
    %126 = vmatprep.subr.mxu0 0.0
    %127 = vmatpush1.msra.mxu0 0.0
    %128 = vmatprep.subr.mxu0 0.0
    %129 = vmatpush1.msra.mxu0 0.0
    %130 = vmatprep.mubr.f32.mxu0 0.0
    %131 = vmatmul.mubr.f32.gmra.mrb[0].mxu0 %v21
    %v132 = vpop.f32.mrb[0].mxu0
    %v133 = vadd.f32 %v59, %v132
    %v134 = vpop.f32.mrb[0].mxu0
    %v135 = vadd.f32 %v63, %v134
    %136 = vdwg.mxu0
    %v137 = vmax.f32 %v133, 0.0
    %v138 = vmax.f32 %v135, 0.0
    %v139 = vld [vmem:[%s3] sm:$0xff]
    %v140 = vld [vmem:[%s3 + $0x8] sm:$0xff]
    %v141 = vld [vmem:[%s3 + $0x10] sm:$0xff]
    %v142 = vld [vmem:[%s3 + $0x18] sm:$0xff]
    %v143 = vld [vmem:[%s3 + $0x20] sm:$0xff]
    %v144 = vld [vmem:[%s3 + $0x28] sm:$0xff]
    %v145 = vld [vmem:[%s3 + $0x30] sm:$0xff]
    %v146 = vld [vmem:[%s3 + $0x38] sm:$0xff]
    %v147 = vld [vmem:[%s3 + $0x40] sm:$0xff]
    %v148 = vld [vmem:[%s3 + $0x48] sm:$0xff]
    %v149 = vld [vmem:[%s3 + $0x50] sm:$0xff]
    %v150 = vld [vmem:[%s3 + $0x58] sm:$0xff]
    %v151 = vld [vmem:[%s3 + $0x60] sm:$0xff]
    %v152 = vld [vmem:[%s3 + $0x68] sm:$0xff]
    %v153 = vld [vmem:[%s3 + $0x70] sm:$0xff]
    %v154 = vld [vmem:[%s3 + $0x78] sm:$0xff]
    %v155 = vld [vmem:[%s3 + $0x80] sm:$0xff]
    %v156 = vld [vmem:[%s3 + $0x88] sm:$0xff]
    %v157 = vld [vmem:[%s3 + $0x90] sm:$0xff]
    %v158 = vld [vmem:[%s3 + $0x98] sm:$0xff]
    %v159 = vld [vmem:[%s3 + $0xa0] sm:$0xff]
    %v160 = vld [vmem:[%s3 + $0xa8] sm:$0xff]
    %v161 = vld [vmem:[%s3 + $0xb0] sm:$0xff]
    %v162 = vld [vmem:[%s3 + $0xb8] sm:$0xff]
    %v163 = vld [vmem:[%s3 + $0xc0] sm:$0xff]
    %v164 = vld [vmem:[%s3 + $0xc8] sm:$0xff]
    %v165 = vld [vmem:[%s3 + $0xd0] sm:$0xff]
    %v166 = vld [vmem:[%s3 + $0xd8] sm:$0xff]
    %v167 = vld [vmem:[%s3 + $0xe0] sm:$0xff]
    %v168 = vld [vmem:[%s3 + $0xe8] sm:$0xff]
    %v169 = vld [vmem:[%s3 + $0xf0] sm:$0xff]
    %v170 = vld [vmem:[%s3 + $0xf8] sm:$0xff]
    %v171 = vld [vmem:[%s4] sm:$0x1]
    %v173 = vlaneseq
    %v174 = vshrl.u32 %v173, 7
    %v175 = vsub.s32 0, %v174
    %v176 = vrot.slane %v171, %v175
    %178 = vmatprep.subr.mxu0 0.0
    %179 = vmatpush1.msra.mxu0 %v139
    %180 = vmatprep.subr.mxu0 0.0
    %181 = vmatpush1.msra.mxu0 %v140
    %182 = vmatprep.subr.mxu0 0.0
    %183 = vmatpush1.msra.mxu0 %v141
    %184 = vmatprep.subr.mxu0 0.0
    %185 = vmatpush1.msra.mxu0 %v142
    %186 = vmatprep.subr.mxu0 0.0
    %187 = vmatpush1.msra.mxu0 %v143
    %188 = vmatprep.subr.mxu0 0.0
    %189 = vmatpush1.msra.mxu0 %v144
    %190 = vmatprep.subr.mxu0 0.0
    %191 = vmatpush1.msra.mxu0 %v145
    %192 = vmatprep.subr.mxu0 0.0
    %193 = vmatpush1.msra.mxu0 %v146
    %194 = vmatprep.subr.mxu0 0.0
    %195 = vmatpush1.msra.mxu0 %v147
    %196 = vmatprep.subr.mxu0 0.0
    %197 = vmatpush1.msra.mxu0 %v148
    %198 = vmatprep.subr.mxu0 0.0
    %199 = vmatpush1.msra.mxu0 %v149
    %200 = vmatprep.subr.mxu0 0.0
    %201 = vmatpush1.msra.mxu0 %v150
    %202 = vmatprep.subr.mxu0 0.0
    %203 = vmatpush1.msra.mxu0 %v151
    %204 = vmatprep.subr.mxu0 0.0
    %205 = vmatpush1.msra.mxu0 %v152
    %206 = vmatprep.subr.mxu0 0.0
    %207 = vmatpush1.msra.mxu0 %v153
    %208 = vmatprep.subr.mxu0 0.0
    %209 = vmatpush1.msra.mxu0 %v154
    %210 = vmatprep.subr.mxu0 0.0
    %211 = vmatpush1.msra.mxu0 %v155
    %212 = vmatprep.subr.mxu0 0.0
    %213 = vmatpush1.msra.mxu0 %v156
    %214 = vmatprep.subr.mxu0 0.0
    %215 = vmatpush1.msra.mxu0 %v157
    %216 = vmatprep.subr.mxu0 0.0
    %217 = vmatpush1.msra.mxu0 %v158
    %218 = vmatprep.subr.mxu0 0.0
    %219 = vmatpush1.msra.mxu0 %v159
    %220 = vmatprep.subr.mxu0 0.0
    %221 = vmatpush1.msra.mxu0 %v160
    %222 = vmatprep.subr.mxu0 0.0
    %223 = vmatpush1.msra.mxu0 %v161
    %224 = vmatprep.subr.mxu0 0.0
    %225 = vmatpush1.msra.mxu0 %v162
    %226 = vmatprep.subr.mxu0 0.0
    %227 = vmatpush1.msra.mxu0 %v163
    %228 = vmatprep.subr.mxu0 0.0
    %229 = vmatpush1.msra.mxu0 %v164
    %230 = vmatprep.subr.mxu0 0.0
    %231 = vmatpush1.msra.mxu0 %v165
    %232 = vmatprep.subr.mxu0 0.0
    %233 = vmatpush1.msra.mxu0 %v166
    %234 = vmatprep.subr.mxu0 0.0
    %235 = vmatpush1.msra.mxu0 %v167
    %236 = vmatprep.subr.mxu0 0.0
    %237 = vmatpush1.msra.mxu0 %v168
    %238 = vmatprep.subr.mxu0 0.0
    %239 = vmatpush1.msra.mxu0 %v169
    %240 = vmatprep.subr.mxu0 0.0
    %241 = vmatpush1.msra.mxu0 %v170
    %242 = vmatprep.mubr.f32.mxu0 %v138
    %243 = vmatmul.mubr.f32.gmra.mrb[0].mxu0 %v137
    %v244 = vpop.f32.mrb[0].mxu0
    %v245 = vadd.f32 %v176, %v244
    %v246 = vpop.f32.mrb[0].mxu0
    %247 = vdwg.mxu0
    %248 = vst [vmem:[#allocation2] sm:$0x3] %v245
    // Predicated region
    $region22: #{pointnet_forward.3} parent=1 // pred_check
      _
    $region23: #{pointnet_forward.3} parent=1 // pred_check_branch
      %250 = sbr.rel (0) target = $region25
    $region24: #{pointnet_forward.3} parent=1 // pred_region
      %s252 = ssub.s32 32, 32
      %253 = vsyncadd [#allocation3], %s252
      %s255 = sshll.u32 [#allocation2], 4
      %s256 = int_to_ptr.vmem [resolvable:$true] %s255
      %258 = dma.vmem_to_hbm [thread:$0]  %s256, 32, %s5, [#allocation3]
    $region25: #{pointnet_forward.3} parent=1 // pred_fallthru
      _
    // Predicated region
    $region26: #{pointnet_forward.3} parent=1 // pred_check
      _
    $region27: #{pointnet_forward.3} parent=1 // pred_check_branch
      %260 = sbr.rel (0) target = $region29
    $region28: #{pointnet_forward.3} parent=1 // pred_region
      %261 = dma.done [#allocation3], 32
    $region29: #{pointnet_forward.3} parent=1 // pred_fallthru
      _
    %262 = vsyncpa [#allocation3], 1

</llo_original>
